<compile_context>
chip_gen: v6e
topology: v6e:2x2x1
jax: 0.10.0
libtpu: 0.0.40
codegen_flags: <defaults>
</compile_context>

<pallas_src>
import functools

import jax
import jax.numpy as jnp
import numpy as np
from jax.experimental import pallas as pl
from jax.experimental.pallas import tpu as pltpu


# --------------------------------- kernel -----------------------------------

def _block_t20_kernel(x_ref, wx_ref, wb_ref, b_ref, o_ref, *, W, nb):
    C = o_ref.shape[1]                                # Cout
    HW = o_ref.shape[2]

    # Grid-invariant masks over flattened output positions (computed once per
    # step, reused across the nb images in this block).
    pos = jax.lax.broadcasted_iota(jnp.int32, (C, HW), 1)
    if (W & (W - 1)) == 0:                            # power-of-two W: avoid %
        col = pos & (W - 1)
    else:
        col = pos % W
    not_last_col = col < (W - 1)                      # neighbour w+1 exists
    not_first_col = col > 0                           # neighbour w-1 exists
    not_last_row = pos < (HW - W)                     # neighbour h+1 exists
    not_first_row = pos >= W                          # neighbour h-1 exists

    # Concatenated biases: rows [0:C]=shortcut, [C:2C]=(1,3) path, [2C:3C]=(3,1).
    b_all = b_ref[...]
    b11 = b_all[0:C]
    ba = b_all[C:2 * C]
    bb = b_all[2 * C:3 * C]

    wx = wx_ref[...]                                  # (4*Cout, Cin), resident
    wb = wb_ref[...]                                  # (3*Cout, Cout), resident

    for i in range(nb):                               # static unroll over images
        x2d = x_ref[i]                                # (Cin, HW), lane-dense

        # ---- fused x-side matmul: [w11 ; wa_{-1} ; wa_0 ; wa_{+1}] @ x ------
        r = jnp.dot(wx, x2d, preferred_element_type=jnp.float32)
        out1 = r[0:C] + b11                           # shortcut 1x1 + BN bias
        y_m1 = r[C:2 * C]                             # (1,3) tap dx = -1
        y_0 = r[2 * C:3 * C]                          # (1,3) tap dx =  0
        y_p1 = r[3 * C:4 * C]                         # (1,3) tap dx = +1

        # ---- path 2a: (1,3) conv + BN + ReLU6 -------------------------------
        a = (y_0
             + jnp.where(not_last_col, pltpu.roll(y_p1, HW - 1, axis=1), 0.0)
             + jnp.where(not_first_col, pltpu.roll(y_m1, 1, axis=1), 0.0))
        a = jnp.clip(a + ba, 0.0, 6.0)

        # ---- path 2b: (3,1) conv + BN + ReLU6 -------------------------------
        z = jnp.dot(wb, a, preferred_element_type=jnp.float32)
        z_m1 = z[0:C]                                 # tap dy = -1
        z_0 = z[C:2 * C]                              # tap dy =  0
        z_p1 = z[2 * C:3 * C]                         # tap dy = +1
        out2 = (z_0
                + jnp.where(not_last_row, pltpu.roll(z_p1, HW - W, axis=1), 0.0)
                + jnp.where(not_first_row, pltpu.roll(z_m1, W, axis=1), 0.0))
        out2 = jnp.clip(out2 + bb, 0.0, 6.0)

        # ---- combine: ReLU(out_1 + out_2) -----------------------------------
        o_ref[i] = jnp.maximum(out1 + out2, 0.0).astype(o_ref.dtype)


def _pick_images_per_step(N):
    """Largest divisor of N that still leaves >= 2 grid steps (keeps both v7x
    TensorCores busy) while amortizing per-step overhead on single-TC chips."""
    best = 1
    for d in range(1, N + 1):
        if N % d == 0 and N // d >= 2:
            best = max(best, d)
    return best


def block_t20_pallas(x_nchw, params, images_per_step=None):
    """x_nchw: (N, Cin, H, W) float32.  Returns (N, Cout, H, W)."""
    N, Cin, H, W = x_nchw.shape
    Cout = params["b_all"].shape[0] // 3
    HW = H * W

    # Cout % 8 == 0 keeps the stacked-tap row slices aligned to the (8,128)
    # f32 tile (no hidden relayout copies); H*W % 128 == 0 keeps stores dense.
    nb = images_per_step if images_per_step is not None else _pick_images_per_step(N)
    assert N % nb == 0

    x2 = x_nchw.reshape(N, Cin, HW)                   # free reshape, no HBM pass
    kernel = functools.partial(_block_t20_kernel, W=W, nb=nb)

    out = pl.pallas_call(
        kernel,
        out_shape=jax.ShapeDtypeStruct((N, Cout, HW), jnp.float32),
        grid_spec=pltpu.PrefetchScalarGridSpec(
            num_scalar_prefetch=0,
            grid=(N // nb,),
            in_specs=[
                pl.BlockSpec((nb, Cin, HW), lambda n: (n, 0, 0)),
                pl.BlockSpec((4 * Cout, Cin), lambda n: (0, 0)),     # fused w
                pl.BlockSpec((3 * Cout, Cout), lambda n: (0, 0)),
                pl.BlockSpec((3 * Cout, 1), lambda n: (0, 0)),       # fused b
            ],
            out_specs=pl.BlockSpec((nb, Cout, HW), lambda n: (n, 0, 0)),
        ),
        compiler_params=pltpu.CompilerParams(
            dimension_semantics=("parallel",)),
    )(x2, params["wx"], params["wb"], params["b_all"])

    return out.reshape(N, Cout, H, W)                 # free reshape back


# ----------------------------- parameter setup ------------------------------

def _fold_bn(gamma, beta, mean, var, eps=1e-5):
    scale = gamma / jnp.sqrt(var + eps)
    bias = beta - mean * scale
    return scale, bias


def make_params(key, Cin, Cout):
    ks = jax.random.split(key, 6)
    # Conv weights in PyTorch OIHW convention.
    w11_oihw = jax.random.normal(ks[0], (Cout, Cin, 1, 1), jnp.float32) * 0.2
    wa_oihw = jax.random.normal(ks[1], (Cout, Cin, 1, 3), jnp.float32) * 0.2
    wb_oihw = jax.random.normal(ks[2], (Cout, Cout, 3, 1), jnp.float32) * 0.2

    def bn(k, C):
        kg, kb, km, kv = jax.random.split(k, 4)
        gamma = 1.0 + 0.1 * jax.random.normal(kg, (C,), jnp.float32)
        beta = 0.1 * jax.random.normal(kb, (C,), jnp.float32)
        mean = 0.1 * jax.random.normal(km, (C,), jnp.float32)
        var = jax.random.uniform(kv, (C,), jnp.float32, minval=0.5, maxval=1.5)
        return gamma, beta, mean, var

    bn11 = bn(ks[3], Cout)
    bnA = bn(ks[4], Cout)
    bnB = bn(ks[5], Cout)

    s11, b11 = _fold_bn(*bn11)
    sA, bA = _fold_bn(*bnA)
    sB, bB = _fold_bn(*bnB)

    # Kernel formats (BN scale folded into conv weights):
    #   wx : (4*Cout, Cin)   rows = [w11 ; wa tap dx=-1 ; dx=0 ; dx=+1]
    #   wb : (3*Cout, Cout)  rows stacked per tap dy = -1, 0, +1
    #   b_all: (3*Cout, 1)   rows = [b11 ; bA ; bB]
    w11 = w11_oihw[:, :, 0, 0] * s11[:, None]
    wa = jnp.transpose(wa_oihw[:, :, 0, :], (2, 0, 1)).reshape(3 * Cout, Cin)
    wa = wa * jnp.tile(sA, 3)[:, None]
    wx = jnp.concatenate([w11, wa], axis=0)

    wb = jnp.transpose(wb_oihw[:, :, :, 0], (2, 0, 1)).reshape(3 * Cout, Cout)
    wb = wb * jnp.tile(sB, 3)[:, None]

    b_all = jnp.concatenate([b11, bA, bB], axis=0).reshape(3 * Cout, 1)

    kernel_params = dict(wx=wx, wb=wb, b_all=b_all)
    ref_params = dict(w11_oihw=w11_oihw, wa_oihw=wa_oihw, wb_oihw=wb_oihw,
                      bn11=bn11, bnA=bnA, bnB=bnB)
    return kernel_params, ref_params


# ------------------------------ JAX reference --------------------------------

def _conv_nchw(x, w, pad_h, pad_w):
    return jax.lax.conv_general_dilated(
        x, w, window_strides=(1, 1),
        padding=[(pad_h, pad_h), (pad_w, pad_w)],
        dimension_numbers=("NCHW", "OIHW", "NCHW"),
        precision=jax.lax.Precision.HIGHEST)


def _bn_eval(x, gamma, beta, mean, var, eps=1e-5):
    c = lambda v: v[None, :, None, None]
    return (x - c(mean)) * (c(gamma) / jnp.sqrt(c(var) + eps)) + c(beta)


def block_t20_ref(x, rp):
    out1 = _bn_eval(_conv_nchw(x, rp["w11_oihw"], 0, 0), *rp["bn11"])
    a = jnp.clip(_bn_eval(_conv_nchw(x, rp["wa_oihw"], 0, 1), *rp["bnA"]),
                 0.0, 6.0)
    out2 = jnp.clip(_bn_eval(_conv_nchw(a, rp["wb_oihw"], 1, 0), *rp["bnB"]),
                    0.0, 6.0)
    return jnp.maximum(out1 + out2, 0.0)


if __name__ == "__main__":
    N, Cin, Cout, H, W = 2, 4, 8, 16, 16   # b_stride=1 (module default)
    key = jax.random.PRNGKey(0)
    kx, kp = jax.random.split(key)
    x = jax.random.normal(kx, (N, Cin, H, W), jnp.float32)

    kernel_params, ref_params = make_params(kp, Cin, Cout)

    run = jax.jit(functools.partial(block_t20_pallas, params=kernel_params))
    y = jax.block_until_ready(run(x))

    y_ref = jax.block_until_ready(block_t20_ref(x, ref_params))
    np.testing.assert_allclose(np.asarray(y), np.asarray(y_ref),
                               atol=1e-4, rtol=1e-4)
    print("KERNEL_OK")
</pallas_src>

<mosaic_0001>
module attributes {stable_mosaic.version = 11 : i64} {
  func.func @_block_t20_kernel(%arg0: i32, %arg1: memref<1x4x256xf32, #tpu.memory_space<vmem>>, %arg2: memref<32x4xf32, #tpu.memory_space<vmem>>, %arg3: memref<24x8xf32, #tpu.memory_space<vmem>>, %arg4: memref<24x1xf32, #tpu.memory_space<vmem>>, %arg5: memref<1x8x256xf32, #tpu.memory_space<vmem>>) attributes {dimension_semantics = [#tpu.dimension_semantics<parallel>], iteration_bounds = array<i64: 2>, scalar_prefetch = 0 : i64, scratch_operands = 0 : i64, tpu.core_type = #tpu.core_type<tc>, window_params = [{transform_indices = @transform_0, window_bounds = array<i64: 1, 4, 256>}, {pipeline_mode = #tpu.pipeline_mode<synchronous>, transform_indices = @transform_1, window_bounds = array<i64: 32, 4>}, {pipeline_mode = #tpu.pipeline_mode<synchronous>, transform_indices = @transform_2, window_bounds = array<i64: 24, 8>}, {pipeline_mode = #tpu.pipeline_mode<synchronous>, transform_indices = @transform_3, window_bounds = array<i64: 24, 1>}, {transform_indices = @transform_4, window_bounds = array<i64: 1, 8, 256>}]} {
    %0 = tpu.iota {dimensions = array<i32: 1>} : vector<8x256xi32>
    %c15_i32 = arith.constant 15 : i32
    %1 = vector.broadcast %c15_i32 : i32 to vector<8x256xi32>
    %2 = arith.andi %0, %1 : vector<8x256xi32>
    %c15_i32_0 = arith.constant 15 : i32
    %3 = vector.broadcast %c15_i32_0 : i32 to vector<8x256xi32>
    %4 = arith.cmpi slt, %2, %3 : vector<8x256xi32>
    %c0_i32 = arith.constant 0 : i32
    %5 = vector.broadcast %c0_i32 : i32 to vector<8x256xi32>
    %6 = arith.cmpi sgt, %2, %5 : vector<8x256xi32>
    %c240_i32 = arith.constant 240 : i32
    %7 = vector.broadcast %c240_i32 : i32 to vector<8x256xi32>
    %8 = arith.cmpi slt, %0, %7 : vector<8x256xi32>
    %c16_i32 = arith.constant 16 : i32
    %9 = vector.broadcast %c16_i32 : i32 to vector<8x256xi32>
    %10 = arith.cmpi sge, %0, %9 : vector<8x256xi32>
    %c0 = arith.constant 0 : index
    %c0_1 = arith.constant 0 : index
    %11 = vector.load %arg4[%c0, %c0_1] : memref<24x1xf32, #tpu.memory_space<vmem>>, vector<24x1xf32>
    %12 = vector.extract_strided_slice %11 {offsets = [0, 0], sizes = [8, 1], strides = [1, 1]} : vector<24x1xf32> to vector<8x1xf32>
    %13 = vector.extract_strided_slice %11 {offsets = [8, 0], sizes = [8, 1], strides = [1, 1]} : vector<24x1xf32> to vector<8x1xf32>
    %14 = vector.extract_strided_slice %11 {offsets = [16, 0], sizes = [8, 1], strides = [1, 1]} : vector<24x1xf32> to vector<8x1xf32>
    %c0_2 = arith.constant 0 : index
    %c0_3 = arith.constant 0 : index
    %15 = vector.load %arg2[%c0_2, %c0_3] : memref<32x4xf32, #tpu.memory_space<vmem>>, vector<32x4xf32>
    %c0_4 = arith.constant 0 : index
    %c0_5 = arith.constant 0 : index
    %16 = vector.load %arg3[%c0_4, %c0_5] : memref<24x8xf32, #tpu.memory_space<vmem>>, vector<24x8xf32>
    %c0_6 = arith.constant 0 : index
    %c0_7 = arith.constant 0 : index
    %c0_8 = arith.constant 0 : index
    %17 = vector.load %arg1[%c0_6, %c0_7, %c0_8] : memref<1x4x256xf32, #tpu.memory_space<vmem>>, vector<1x4x256xf32>
    %18 = vector.shape_cast %17 : vector<1x4x256xf32> to vector<4x256xf32>
    %cst = arith.constant dense<0.000000e+00> : vector<32x256xf32>
    %19 = tpu.matmul %15, %18, %cst {dimension_numbers = #tpu.dot_dimension_numbers<[1], [0], [0], [1], [0, 0, 1, 1], [], []>} : vector<32x4xf32>, vector<4x256xf32>, vector<32x256xf32> -> vector<32x256xf32>
    %20 = vector.extract_strided_slice %19 {offsets = [0, 0], sizes = [8, 256], strides = [1, 1]} : vector<32x256xf32> to vector<8x256xf32>
    %21 = vector.broadcast %12 : vector<8x1xf32> to vector<8x256xf32>
    %22 = arith.addf %20, %21 : vector<8x256xf32>
    %23 = vector.extract_strided_slice %19 {offsets = [8, 0], sizes = [8, 256], strides = [1, 1]} : vector<32x256xf32> to vector<8x256xf32>
    %24 = vector.extract_strided_slice %19 {offsets = [16, 0], sizes = [8, 256], strides = [1, 1]} : vector<32x256xf32> to vector<8x256xf32>
    %25 = vector.extract_strided_slice %19 {offsets = [24, 0], sizes = [8, 256], strides = [1, 1]} : vector<32x256xf32> to vector<8x256xf32>
    %c255_i32 = arith.constant 255 : i32
    %26 = tpu.dynamic_rotate %25 by %c255_i32 dim 1 : vector<8x256xf32>, i32 -> vector<8x256xf32>
    %cst_9 = arith.constant 0.000000e+00 : f32
    %27 = vector.broadcast %cst_9 : f32 to vector<8x256xf32>
    %28 = arith.select %4, %26, %27 : vector<8x256xi1>, vector<8x256xf32>
    %29 = arith.addf %24, %28 : vector<8x256xf32>
    %c1_i32 = arith.constant 1 : i32
    %30 = tpu.dynamic_rotate %23 by %c1_i32 dim 1 : vector<8x256xf32>, i32 -> vector<8x256xf32>
    %cst_10 = arith.constant 0.000000e+00 : f32
    %31 = vector.broadcast %cst_10 : f32 to vector<8x256xf32>
    %32 = arith.select %6, %30, %31 : vector<8x256xi1>, vector<8x256xf32>
    %33 = arith.addf %29, %32 : vector<8x256xf32>
    %34 = vector.broadcast %13 : vector<8x1xf32> to vector<8x256xf32>
    %35 = arith.addf %33, %34 : vector<8x256xf32>
    %cst_11 = arith.constant 0.000000e+00 : f32
    %cst_12 = arith.constant 6.000000e+00 : f32
    %36 = vector.broadcast %cst_11 : f32 to vector<8x256xf32>
    %37 = arith.maximumf %36, %35 : vector<8x256xf32>
    %38 = vector.broadcast %cst_12 : f32 to vector<8x256xf32>
    %39 = arith.minimumf %38, %37 : vector<8x256xf32>
    %cst_13 = arith.constant dense<0.000000e+00> : vector<24x256xf32>
    %40 = tpu.matmul %16, %39, %cst_13 {dimension_numbers = #tpu.dot_dimension_numbers<[1], [0], [0], [1], [0, 0, 1, 1], [], []>} : vector<24x8xf32>, vector<8x256xf32>, vector<24x256xf32> -> vector<24x256xf32>
    %41 = vector.extract_strided_slice %40 {offsets = [0, 0], sizes = [8, 256], strides = [1, 1]} : vector<24x256xf32> to vector<8x256xf32>
    %42 = vector.extract_strided_slice %40 {offsets = [8, 0], sizes = [8, 256], strides = [1, 1]} : vector<24x256xf32> to vector<8x256xf32>
    %43 = vector.extract_strided_slice %40 {offsets = [16, 0], sizes = [8, 256], strides = [1, 1]} : vector<24x256xf32> to vector<8x256xf32>
    %c240_i32_14 = arith.constant 240 : i32
    %44 = tpu.dynamic_rotate %43 by %c240_i32_14 dim 1 : vector<8x256xf32>, i32 -> vector<8x256xf32>
    %cst_15 = arith.constant 0.000000e+00 : f32
    %45 = vector.broadcast %cst_15 : f32 to vector<8x256xf32>
    %46 = arith.select %8, %44, %45 : vector<8x256xi1>, vector<8x256xf32>
    %47 = arith.addf %42, %46 : vector<8x256xf32>
    %c16_i32_16 = arith.constant 16 : i32
    %48 = tpu.dynamic_rotate %41 by %c16_i32_16 dim 1 : vector<8x256xf32>, i32 -> vector<8x256xf32>
    %cst_17 = arith.constant 0.000000e+00 : f32
    %49 = vector.broadcast %cst_17 : f32 to vector<8x256xf32>
    %50 = arith.select %10, %48, %49 : vector<8x256xi1>, vector<8x256xf32>
    %51 = arith.addf %47, %50 : vector<8x256xf32>
    %52 = vector.broadcast %14 : vector<8x1xf32> to vector<8x256xf32>
    %53 = arith.addf %51, %52 : vector<8x256xf32>
    %cst_18 = arith.constant 0.000000e+00 : f32
    %cst_19 = arith.constant 6.000000e+00 : f32
    %54 = vector.broadcast %cst_18 : f32 to vector<8x256xf32>
    %55 = arith.maximumf %54, %53 : vector<8x256xf32>
    %56 = vector.broadcast %cst_19 : f32 to vector<8x256xf32>
    %57 = arith.minimumf %56, %55 : vector<8x256xf32>
    %58 = arith.addf %22, %57 : vector<8x256xf32>
    %cst_20 = arith.constant 0.000000e+00 : f32
    %59 = vector.broadcast %cst_20 : f32 to vector<8x256xf32>
    %60 = arith.maximumf %58, %59 : vector<8x256xf32>
    %c0_21 = arith.constant 0 : index
    %c0_22 = arith.constant 0 : index
    %c0_23 = arith.constant 0 : index
    %61 = vector.load %arg5[%c0_21, %c0_22, %c0_23] : memref<1x8x256xf32, #tpu.memory_space<vmem>>, vector<1x8x256xf32>
    %62 = vector.shape_cast %61 : vector<1x8x256xf32> to vector<8x256xf32>
    %63 = vector.shape_cast %60 : vector<8x256xf32> to vector<1x8x256xf32>
    tpu.vector_store %arg5[%c0_21, %c0_22, %c0_23], %63 {strides = array<i32>} : memref<1x8x256xf32, #tpu.memory_space<vmem>>, vector<1x8x256xf32>,
    return
  }
  func.func @transform_0(%arg0: i32) -> (i32, i32, i32) {
    %c0_i32 = arith.constant 0 : i32
    %c0_i32_0 = arith.constant 0 : i32
    %c0_i32_1 = arith.constant 0 : i32
    return %arg0, %c0_i32, %c0_i32_0 : i32, i32, i32
  }
  func.func @transform_1(%arg0: i32) -> (i32, i32) {
    %c0_i32 = arith.constant 0 : i32
    %c0_i32_0 = arith.constant 0 : i32
    %c0_i32_1 = arith.constant 0 : i32
    return %c0_i32, %c0_i32_0 : i32, i32
  }
  func.func @transform_2(%arg0: i32) -> (i32, i32) {
    %c0_i32 = arith.constant 0 : i32
    %c0_i32_0 = arith.constant 0 : i32
    %c0_i32_1 = arith.constant 0 : i32
    return %c0_i32, %c0_i32_0 : i32, i32
  }
  func.func @transform_3(%arg0: i32) -> (i32, i32) {
    %c0_i32 = arith.constant 0 : i32
    %c0_i32_0 = arith.constant 0 : i32
    %c0_i32_1 = arith.constant 0 : i32
    return %c0_i32, %c0_i32_0 : i32, i32
  }
  func.func @transform_4(%arg0: i32) -> (i32, i32, i32) {
    %c0_i32 = arith.constant 0 : i32
    %c0_i32_0 = arith.constant 0 : i32
    %c0_i32_1 = arith.constant 0 : i32
    return %arg0, %c0_i32, %c0_i32_0 : i32, i32, i32
  }
}

</mosaic_0001>

<llo_original>
// kernel: block_t20_pallas.1
$region0: #{block_t20_pallas.1}
  #allocation0 [shape = 'u32[]', space=smem, size = 0x4, offset = 0x4, fixed_abs, tag = 'smem constant byte address 0x4 - core index']
  #allocation1 [shape = 'u32[144,128]{1,0:T(1,128)}', space=vmem, size = 0x12000, scoped, tag = 'internal scratch']
  %s0 = inlined_call_operand.vmem [shape: f32[2,4,256], index: 0, kind: input, shape index: {}]
  %s1 = inlined_call_operand.vmem [shape: f32[32,4], index: 1, kind: input, shape index: {}]
  %s2 = inlined_call_operand.vmem [shape: f32[24,8], index: 2, kind: input, shape index: {}]
  %s3 = inlined_call_operand.vmem [shape: f32[24,1], index: 3, kind: input, shape index: {}]
  %s4 = inlined_call_operand.vmem [shape: f32[2,8,256], index: 4, kind: output, shape index: {}]
  %s5 = sld [smem:[#allocation0]]
  $region49: #{block_t20_pallas.1} parent=0
    _
  %s7 = ssub.s32 1, %s5
  %s8 = scalar_select 0, %s7, %s5
  loop: start=0, step=1, limit=4
  $region2: #{block_t20_pallas.1} parent=0 // loop_pre_header
    _
  $region3: #{block_t20_pallas.1} parent=0 // loop_header
    %s10 = sphi 0, %s14
    %p11 = scmp.ge.s32.totalorder %s10, 4
    %s20 = sphi 0, %s22
    %s23 = sphi 0, %s20
    %s24 = sphi 0, %s23
    %s40 = sphi 0, %s24
    %s44 = sphi 0, %s44
    %s46 = sphi 0, %s44
    %s47 = sphi 0, %s46
    %s61 = sphi 0, %s47
    %s65 = sphi 0, %s65
    %s67 = sphi 0, %s65
    %s68 = sphi 0, %s67
    %s82 = sphi 0, %s68
    %s86 = sphi 0, %s86
    %s88 = sphi 0, %s86
    %s89 = sphi 0, %s88
    %s103 = sphi 0, %s89
    %s109 = sphi 0, %s111
    %s112 = sphi 0, %s109
    %s113 = sphi 0, %s112
    %s129 = sphi 0, %s113
  $region4: #{block_t20_pallas.1} parent=0 // loop_header_branch
    %13 = sbr.rel (%p11) target = $region8
  $region5: #{block_t20_pallas.1} parent=0 // loop_body
    %s15 = ssub.s32 %s10, 1
    %s16 = ssub.s32 %s10, 2
    %s17 = sadd.s32 %s10, 1
    %s18 = ssub.s32 %s10, %s17
    %p19 = scmp.eq.s32.totalorder %s18, 0
    %s21 = sadd.s32 %s20, 1
    %s22 = scalar_select %p19, %s20, %s21
    %p25 = pneg %p19
    %p26 = scmp.eq.s32.totalorder %s10, 1
    %p27 = por %p25, %p26
    %p28 = scmp.ne.s32.totalorder %s20, %s23
    %p29 = scmp.eq.s32.totalorder %s10, 0
    %p30 = por %p28, %p29
    %p31 = scmp.ne.s32.totalorder %s20, %s23
    %p32 = scmp.eq.s32.totalorder %s15, 1
    %p33 = por %p31, %p32
    %p34 = scmp.ne.s32.totalorder %s23, %s24
    %p35 = scmp.eq.s32.totalorder %s15, 0
    %p36 = por %p34, %p35
    %p37 = scmp.ne.s32.totalorder %s23, %s24
    %p38 = scmp.eq.s32.totalorder %s16, 1
    %p39 = por %p37, %p38
    %p41 = scmp.ne.s32.totalorder %s24, %s40
    %p42 = scmp.eq.s32.totalorder %s16, 0
    %p43 = por %p41, %p42
    %s45 = sadd.s32 %s44, 1
    %p48 = scmp.eq.s32.totalorder %s10, 1
    %p49 = scmp.ne.s32.totalorder %s44, %s46
    %p50 = scmp.eq.s32.totalorder %s10, 0
    %p51 = por %p49, %p50
    %p52 = scmp.ne.s32.totalorder %s44, %s46
    %p53 = scmp.eq.s32.totalorder %s15, 1
    %p54 = por %p52, %p53
    %p55 = scmp.ne.s32.totalorder %s46, %s47
    %p56 = scmp.eq.s32.totalorder %s15, 0
    %p57 = por %p55, %p56
    %p58 = scmp.ne.s32.totalorder %s46, %s47
    %p59 = scmp.eq.s32.totalorder %s16, 1
    %p60 = por %p58, %p59
    %p62 = scmp.ne.s32.totalorder %s47, %s61
    %p63 = scmp.eq.s32.totalorder %s16, 0
    %p64 = por %p62, %p63
    %s66 = sadd.s32 %s65, 1
    %p69 = scmp.eq.s32.totalorder %s10, 1
    %p70 = scmp.ne.s32.totalorder %s65, %s67
    %p71 = scmp.eq.s32.totalorder %s10, 0
    %p72 = por %p70, %p71
    %p73 = scmp.ne.s32.totalorder %s65, %s67
    %p74 = scmp.eq.s32.totalorder %s15, 1
    %p75 = por %p73, %p74
    %p76 = scmp.ne.s32.totalorder %s67, %s68
    %p77 = scmp.eq.s32.totalorder %s15, 0
    %p78 = por %p76, %p77
    %p79 = scmp.ne.s32.totalorder %s67, %s68
    %p80 = scmp.eq.s32.totalorder %s16, 1
    %p81 = por %p79, %p80
    %p83 = scmp.ne.s32.totalorder %s68, %s82
    %p84 = scmp.eq.s32.totalorder %s16, 0
    %p85 = por %p83, %p84
    %s87 = sadd.s32 %s86, 1
    %p90 = scmp.eq.s32.totalorder %s10, 1
    %p91 = scmp.ne.s32.totalorder %s86, %s88
    %p92 = scmp.eq.s32.totalorder %s10, 0
    %p93 = por %p91, %p92
    %p94 = scmp.ne.s32.totalorder %s86, %s88
    %p95 = scmp.eq.s32.totalorder %s15, 1
    %p96 = por %p94, %p95
    %p97 = scmp.ne.s32.totalorder %s88, %s89
    %p98 = scmp.eq.s32.totalorder %s15, 0
    %p99 = por %p97, %p98
    %p100 = scmp.ne.s32.totalorder %s88, %s89
    %p101 = scmp.eq.s32.totalorder %s16, 1
    %p102 = por %p100, %p101
    %p104 = scmp.ne.s32.totalorder %s89, %s103
    %p105 = scmp.eq.s32.totalorder %s16, 0
    %p106 = por %p104, %p105
    %s107 = ssub.s32 %s10, %s17
    %p108 = scmp.eq.s32.totalorder %s107, 0
    %s110 = sadd.s32 %s109, 1
    %s111 = scalar_select %p108, %s109, %s110
    %p114 = pneg %p108
    %p115 = scmp.eq.s32.totalorder %s10, 1
    %p116 = por %p114, %p115
    %p117 = scmp.ne.s32.totalorder %s109, %s112
    %p118 = scmp.eq.s32.totalorder %s10, 0
    %p119 = por %p117, %p118
    %p120 = scmp.ne.s32.totalorder %s109, %s112
    %p121 = scmp.eq.s32.totalorder %s15, 1
    %p122 = por %p120, %p121
    %p123 = scmp.ne.s32.totalorder %s112, %s113
    %p124 = scmp.eq.s32.totalorder %s15, 0
    %p125 = por %p123, %p124
    %p126 = scmp.ne.s32.totalorder %s112, %s113
    %p127 = scmp.eq.s32.totalorder %s16, 1
    %p128 = por %p126, %p127
    %p130 = scmp.ne.s32.totalorder %s113, %s129
    %p131 = scmp.eq.s32.totalorder %s16, 0
    %p132 = por %p130, %p131
    %p133 = scmp.le.s32.totalorder 1, %s10
    %p134 = scmp.lt.s32.totalorder %s10, 3
    %p135 = pnand %p133, %p134
    %p136 = pneg %p135
    // Predicated region
    $region9: #{block_t20_pallas.1} parent=5 // pred_check
      _
    $region10: #{block_t20_pallas.1} parent=5 // pred_check_branch
      %138 = sbr.rel (%p135) target = $region12
    $region11: #{block_t20_pallas.1} parent=5 // pred_region
      %s139 = ssub.s32 %s10, 1
      // Predicated region
      $region13: #{block_t20_pallas.1} parent=11 // pred_check
        %p140 = pneg %p57
      $region14: #{block_t20_pallas.1} parent=11 // pred_check_branch
        %142 = sbr.rel (%p140) target = $region16
      $region15: #{block_t20_pallas.1} parent=11 // pred_region
        _
      $region16: #{block_t20_pallas.1} parent=11 // pred_fallthru
        _
      // Predicated region
      $region17: #{block_t20_pallas.1} parent=11 // pred_check
        %p143 = pneg %p78
      $region18: #{block_t20_pallas.1} parent=11 // pred_check_branch
        %145 = sbr.rel (%p143) target = $region20
      $region19: #{block_t20_pallas.1} parent=11 // pred_region
        _
      $region20: #{block_t20_pallas.1} parent=11 // pred_fallthru
        _
      // Predicated region
      $region21: #{block_t20_pallas.1} parent=11 // pred_check
        %p146 = pneg %p99
      $region22: #{block_t20_pallas.1} parent=11 // pred_check_branch
        %148 = sbr.rel (%p146) target = $region24
      $region23: #{block_t20_pallas.1} parent=11 // pred_region
        _
      $region24: #{block_t20_pallas.1} parent=11 // pred_fallthru
        _
    $region12: #{block_t20_pallas.1} parent=5 // pred_fallthru
      _
    %p149 = scmp.lt.s32.totalorder %s10, 2
    // Predicated region
    $region25: #{block_t20_pallas.1} parent=5 // pred_check
      %p150 = pneg %p149
    $region26: #{block_t20_pallas.1} parent=5 // pred_check_branch
      %152 = sbr.rel (%p150) target = $region28
    $region27: #{block_t20_pallas.1} parent=5 // pred_region
      // Predicated region
      $region29: #{block_t20_pallas.1} parent=27 // pred_check
        %p153 = pneg %p30
      $region30: #{block_t20_pallas.1} parent=27 // pred_check_branch
        %155 = sbr.rel (%p153) target = $region32
      $region31: #{block_t20_pallas.1} parent=27 // pred_region
        %p156 = scmp.lt.s32.totalorder %s10, 1
        %s157 = scalar_select %p156, %s10, 1
        %s158 = smul.addr %s157, 2
        %s159 = smul.addr %s158, 4
        %s160 = scalar_lea.vmem %s0, %s159
      $region32: #{block_t20_pallas.1} parent=27 // pred_fallthru
        _
    $region28: #{block_t20_pallas.1} parent=5 // pred_fallthru
      _
    %p161 = scmp.le.s32.totalorder 1, %s10
    %p162 = scmp.lt.s32.totalorder %s10, 3
    %p163 = pnand %p161, %p162
    %p164 = pneg %p163
    // Predicated region
    $region33: #{block_t20_pallas.1} parent=5 // pred_check
      _
    $region34: #{block_t20_pallas.1} parent=5 // pred_check_branch
      %166 = sbr.rel (%p163) target = $region36
    $region35: #{block_t20_pallas.1} parent=5 // pred_region
      %s167 = ssub.s32 %s10, 1
      %p168 = scmp.lt.s32.totalorder %s15, 1
      %s169 = scalar_select %p168, %s15, 1
      %s170 = smul.addr %s169, 2
      %s171 = smul.addr %s170, 4
      %s172 = scalar_lea.vmem %s0, %s171
      %p173 = pneg %p36
      %p174 = pneg %p33
      %p175 = pneg %p57
      %p176 = pneg %p54
      %p177 = pneg %p78
      %p178 = pneg %p75
      %p179 = pneg %p99
      %p180 = pneg %p96
      %p181 = pneg %p125
      %p182 = pneg %p122
      %p183 = scmp.lt.s32.totalorder %s15, 1
      %s184 = scalar_select %p183, %s15, 1
      %s185 = smul.addr %s184, 2
      %s186 = smul.addr %s185, 8
      %s187 = scalar_lea.vmem %s4, %s186
      %p188 = scmp.lt.s32.totalorder %s15, 1
      %s189 = scalar_select %p188, %s15, 1
      %s190 = smul.addr %s189, 2
      %s191 = smul.addr %s190, 4
      %s192 = scalar_lea.vmem %s0, %s191
      %p193 = scmp.lt.s32.totalorder %s15, 1
      %s194 = scalar_select %p193, %s15, 1
      %s195 = smul.addr %s194, 2
      %s196 = smul.addr %s195, 8
      %s197 = scalar_lea.vmem %s4, %s196
      %v198 = vlaneseq
      %v199 = vand.u32 %v198, 127
      %v200 = vadd.s32 %v199, 128
      %v201 = vand.u32 %v199, 15
      %v202 = vand.u32 %v200, 15
      %vm203 = vcmp.lt.s32.totalorder %v201, 15
      %vm204 = vcmp.lt.s32.totalorder %v202, 15
      %vm205 = vcmp.gt.s32.totalorder %v201, 0
      %vm206 = vcmp.gt.s32.totalorder %v202, 0
      %vm207 = vcmp.lt.s32.totalorder %v199, 240
      %vm208 = vcmp.lt.s32.totalorder %v200, 240
      %vm209 = vcmp.ge.s32.totalorder %v199, 16
      %vm210 = vcmp.ge.s32.totalorder %v200, 16
      %v211 = vld [vmem:[%s3] sm:$0xff]
      %v212 = vld [vmem:[%s3 + $0x8] sm:$0xff]
      %v213 = vld [vmem:[%s3 + $0x10] sm:$0xff]
      %v214 = vld [vmem:[%s1] sm:$0xff]
      %v215 = vld [vmem:[%s1 + $0x8] sm:$0xff]
      %v216 = vld [vmem:[%s1 + $0x10] sm:$0xff]
      %v217 = vld [vmem:[%s1 + $0x18] sm:$0xff]
      %v218 = vld [vmem:[%s2] sm:$0xff]
      %v219 = vld [vmem:[%s2 + $0x8] sm:$0xff]
      %v220 = vld [vmem:[%s2 + $0x10] sm:$0xff]
      %v221 = vld [vmem:[%s192] sm:$0xff]
      %v223 = vcombine.high %v221, %v221
      %vm224 = vcmask 31744
      %v226 = vsel %vm224, %v214, 0
      %v229 = vsel %vm224, %v215, 0
      %v232 = vsel %vm224, %v216, 0
      %v235 = vsel %vm224, %v217, 0
      %vm237 = vcmask 1043456
      %v238 = vsel %vm237, %v221, 0
      %v240 = vsel %vm237, %v223, 0
      %242 = vmatprep.subr.mxu0 0.0
      %243 = vmatpush1.msra.mxu0 0.0
      %244 = vmatprep.subr.mxu0 0.0
      %245 = vmatpush1.msra.mxu0 0.0
      %246 = vmatprep.subr.mxu0 0.0
      %247 = vmatpush1.msra.mxu0 0.0
      %248 = vmatprep.subr.mxu0 0.0
      %249 = vmatpush1.msra.mxu0 0.0
      %250 = vmatprep.subr.mxu0 0.0
      %251 = vmatpush1.msra.mxu0 0.0
      %252 = vmatprep.subr.mxu0 0.0
      %253 = vmatpush1.msra.mxu0 0.0
      %254 = vmatprep.subr.mxu0 0.0
      %255 = vmatpush1.msra.mxu0 0.0
      %256 = vmatprep.subr.mxu0 0.0
      %257 = vmatpush1.msra.mxu0 0.0
      %258 = vmatprep.subr.mxu0 0.0
      %259 = vmatpush1.msra.mxu0 0.0
      %260 = vmatprep.subr.mxu0 0.0
      %261 = vmatpush1.msra.mxu0 0.0
      %262 = vmatprep.subr.mxu0 0.0
      %263 = vmatpush1.msra.mxu0 0.0
      %264 = vmatprep.subr.mxu0 0.0
      %265 = vmatpush1.msra.mxu0 0.0
      %266 = vmatprep.subr.mxu0 0.0
      %267 = vmatpush1.msra.mxu0 0.0
      %268 = vmatprep.subr.mxu0 0.0
      %269 = vmatpush1.msra.mxu0 0.0
      %270 = vmatprep.subr.mxu0 0.0
      %271 = vmatpush1.msra.mxu0 0.0
      %272 = vmatprep.subr.mxu0 %v240
      %273 = vmatpush1.msra.mxu0 %v238
      %274 = vmatprep.subr.mxu0 0.0
      %275 = vmatpush2.msra.mxu0 0.0
      %276 = vmatprep.subr.mxu0 0.0
      %277 = vmatpush2.msra.mxu0 0.0
      %278 = vmatprep.subr.mxu0 0.0
      %279 = vmatpush2.msra.mxu0 0.0
      %280 = vmatprep.subr.mxu0 0.0
      %281 = vmatpush2.msra.mxu0 0.0
      %282 = vmatprep.subr.mxu0 0.0
      %283 = vmatpush2.msra.mxu0 0.0
      %284 = vmatprep.subr.mxu0 0.0
      %285 = vmatpush2.msra.mxu0 0.0
      %286 = vmatprep.subr.mxu0 0.0
      %287 = vmatpush2.msra.mxu0 0.0
      %288 = vmatprep.subr.mxu0 0.0
      %289 = vmatpush2.msra.mxu0 0.0
      %290 = vmatprep.subr.mxu0 0.0
      %291 = vmatpush2.msra.mxu0 0.0
      %292 = vmatprep.subr.mxu0 0.0
      %293 = vmatpush2.msra.mxu0 0.0
      %294 = vmatprep.subr.mxu0 0.0
      %295 = vmatpush2.msra.mxu0 0.0
      %296 = vmatprep.subr.mxu0 0.0
      %297 = vmatpush2.msra.mxu0 0.0
      %298 = vmatprep.subr.mxu0 0.0
      %299 = vmatpush2.msra.mxu0 0.0
      %300 = vmatprep.subr.mxu0 0.0
      %301 = vmatpush2.msra.mxu0 0.0
      %302 = vmatprep.subr.mxu0 0.0
      %303 = vmatpush2.msra.mxu0 0.0
      %304 = vmatprep.subr.mxu0 0.0
      %305 = vmatpush2.msra.mxu0 0.0
      %306 = vmatprep.mubr.f32.mxu0 0.0
      %307 = vmatmul.mubr.f32.gmra.mxu0 %v226
      %v308 = vpop.f32.mrf.mxu0
      %v309 = vadd.f32 0.0, %v308
      %v310 = vpop.f32.mrf.mxu0
      %v311 = vadd.f32 0.0, %v310
      %312 = vmatprep.mubr.f32.mxu0 0.0
      %313 = vmatmul.mubr.f32.gmra.mxu0 %v229
      %v314 = vpop.f32.mrf.mxu0
      %v315 = vadd.f32 0.0, %v314
      %v316 = vpop.f32.mrf.mxu0
      %v317 = vadd.f32 0.0, %v316
      %318 = vmatprep.mubr.f32.mxu0 0.0
      %319 = vmatmul.mubr.f32.gmra.mxu0 %v232
      %v320 = vpop.f32.mrf.mxu0
      %v321 = vadd.f32 0.0, %v320
      %v322 = vpop.f32.mrf.mxu0
      %v323 = vadd.f32 0.0, %v322
      %324 = vmatprep.mubr.f32.mxu0 0.0
      %325 = vmatmul.mubr.f32.gmra.mxu0 %v235
      %v326 = vpop.f32.mrf.mxu0
      %v327 = vadd.f32 0.0, %v326
      %v328 = vpop.f32.mrf.mxu0
      %v329 = vadd.f32 0.0, %v328
      %330 = vdwg.mxu0
      %332 = vset.pattern.permute.xlu0 0
      %333 = vperm.xlu0 %332, %v211
      %v334 = vpop.permute.xlu0 %333
      %v336 = vadd.f32 %v309, %v334
      %v337 = vadd.f32 %v311, %v334
      %338 = vrot.lane.b32.xlu0 %v327, 127
      %v339 = vpop.permute.xlu0 %338
      %340 = vrot.lane.b32.xlu0 %v329, 127
      %v341 = vpop.permute.xlu0 %340
      %vm342 = vcmp.lt.s32.totalorder %v199, 127
      %v343 = vsel %vm342, %v339, %v341
      %v344 = vsel %vm342, %v341, %v339
      %v345 = vsel %vm203, %v343, 0.0
      %v346 = vsel %vm204, %v344, 0.0
      %v347 = vadd.f32 %v321, %v345
      %v348 = vadd.f32 %v323, %v346
      %349 = vrot.lane.b32.xlu0 %v315, 1
      %v350 = vpop.permute.xlu0 %349
      %351 = vrot.lane.b32.xlu0 %v317, 1
      %v352 = vpop.permute.xlu0 %351
      %vm353 = vcmp.lt.s32.totalorder %v199, 1
      %v354 = vsel %vm353, %v350, %v352
      %v355 = vsel %vm353, %v352, %v350
      %v356 = vsel %vm205, %v355, 0.0
      %v357 = vsel %vm206, %v354, 0.0
      %v358 = vadd.f32 %v347, %v356
      %v359 = vadd.f32 %v348, %v357
      %361 = vset.pattern.permute.xlu0 0
      %362 = vperm.xlu0 %361, %v212
      %v363 = vpop.permute.xlu0 %362
      %v365 = vadd.f32 %v358, %v363
      %v366 = vadd.f32 %v359, %v363
      %v367 = vmax.f32 %v365, 0.0
      %v368 = vmax.f32 %v366, 0.0
      %v369 = vmin.f32 %v367, 6.0
      %v370 = vmin.f32 %v368, 6.0
      %vm371 = vcmask 64512
      %v373 = vsel %vm371, %v218, 0
      %v376 = vsel %vm371, %v219, 0
      %v379 = vsel %vm371, %v220, 0
      %381 = vmatprep.subr.mxu0 0.0
      %382 = vmatpush1.msra.mxu0 0.0
      %383 = vmatprep.subr.mxu0 0.0
      %384 = vmatpush1.msra.mxu0 0.0
      %385 = vmatprep.subr.mxu0 0.0
      %386 = vmatpush1.msra.mxu0 0.0
      %387 = vmatprep.subr.mxu0 0.0
      %388 = vmatpush1.msra.mxu0 0.0
      %389 = vmatprep.subr.mxu0 0.0
      %390 = vmatpush1.msra.mxu0 0.0
      %391 = vmatprep.subr.mxu0 0.0
      %392 = vmatpush1.msra.mxu0 0.0
      %393 = vmatprep.subr.mxu0 0.0
      %394 = vmatpush1.msra.mxu0 0.0
      %395 = vmatprep.subr.mxu0 0.0
      %396 = vmatpush1.msra.mxu0 0.0
      %397 = vmatprep.subr.mxu0 0.0
      %398 = vmatpush1.msra.mxu0 0.0
      %399 = vmatprep.subr.mxu0 0.0
      %400 = vmatpush1.msra.mxu0 0.0
      %401 = vmatprep.subr.mxu0 0.0
      %402 = vmatpush1.msra.mxu0 0.0
      %403 = vmatprep.subr.mxu0 0.0
      %404 = vmatpush1.msra.mxu0 0.0
      %405 = vmatprep.subr.mxu0 0.0
      %406 = vmatpush1.msra.mxu0 0.0
      %407 = vmatprep.subr.mxu0 0.0
      %408 = vmatpush1.msra.mxu0 0.0
      %409 = vmatprep.subr.mxu0 0.0
      %410 = vmatpush1.msra.mxu0 0.0
      %411 = vmatprep.subr.mxu0 %v370
      %412 = vmatpush1.msra.mxu0 %v369
      %413 = vmatprep.subr.mxu0 0.0
      %414 = vmatpush2.msra.mxu0 0.0
      %415 = vmatprep.subr.mxu0 0.0
      %416 = vmatpush2.msra.mxu0 0.0
      %417 = vmatprep.subr.mxu0 0.0
      %418 = vmatpush2.msra.mxu0 0.0
      %419 = vmatprep.subr.mxu0 0.0
      %420 = vmatpush2.msra.mxu0 0.0
      %421 = vmatprep.subr.mxu0 0.0
      %422 = vmatpush2.msra.mxu0 0.0
      %423 = vmatprep.subr.mxu0 0.0
      %424 = vmatpush2.msra.mxu0 0.0
      %425 = vmatprep.subr.mxu0 0.0
      %426 = vmatpush2.msra.mxu0 0.0
      %427 = vmatprep.subr.mxu0 0.0
      %428 = vmatpush2.msra.mxu0 0.0
      %429 = vmatprep.subr.mxu0 0.0
      %430 = vmatpush2.msra.mxu0 0.0
      %431 = vmatprep.subr.mxu0 0.0
      %432 = vmatpush2.msra.mxu0 0.0
      %433 = vmatprep.subr.mxu0 0.0
      %434 = vmatpush2.msra.mxu0 0.0
      %435 = vmatprep.subr.mxu0 0.0
      %436 = vmatpush2.msra.mxu0 0.0
      %437 = vmatprep.subr.mxu0 0.0
      %438 = vmatpush2.msra.mxu0 0.0
      %439 = vmatprep.subr.mxu0 0.0
      %440 = vmatpush2.msra.mxu0 0.0
      %441 = vmatprep.subr.mxu0 0.0
      %442 = vmatpush2.msra.mxu0 0.0
      %443 = vmatprep.subr.mxu0 0.0
      %444 = vmatpush2.msra.mxu0 0.0
      %445 = vmatprep.mubr.f32.mxu0 0.0
      %446 = vmatmul.mubr.f32.gmra.mxu0 %v373
      %v447 = vpop.f32.mrf.mxu0
      %v448 = vadd.f32 0.0, %v447
      %v449 = vpop.f32.mrf.mxu0
      %v450 = vadd.f32 0.0, %v449
      %451 = vmatprep.mubr.f32.mxu0 0.0
      %452 = vmatmul.mubr.f32.gmra.mxu0 %v376
      %v453 = vpop.f32.mrf.mxu0
      %v454 = vadd.f32 0.0, %v453
      %v455 = vpop.f32.mrf.mxu0
      %v456 = vadd.f32 0.0, %v455
      %457 = vmatprep.mubr.f32.mxu0 0.0
      %458 = vmatmul.mubr.f32.gmra.mxu0 %v379
      %v459 = vpop.f32.mrf.mxu0
      %v460 = vadd.f32 0.0, %v459
      %v461 = vpop.f32.mrf.mxu0
      %v462 = vadd.f32 0.0, %v461
      %463 = vdwg.mxu0
      %464 = vrot.lane.b32.xlu0 %v460, 112
      %v465 = vpop.permute.xlu0 %464
      %466 = vrot.lane.b32.xlu0 %v462, 112
      %v467 = vpop.permute.xlu0 %466
      %vm468 = vcmp.lt.s32.totalorder %v199, 112
      %v469 = vsel %vm468, %v465, %v467
      %v470 = vsel %vm468, %v467, %v465
      %v471 = vsel %vm207, %v469, 0.0
      %v472 = vsel %vm208, %v470, 0.0
      %v473 = vadd.f32 %v454, %v471
      %v474 = vadd.f32 %v456, %v472
      %475 = vrot.lane.b32.xlu0 %v448, 16
      %v476 = vpop.permute.xlu0 %475
      %477 = vrot.lane.b32.xlu0 %v450, 16
      %v478 = vpop.permute.xlu0 %477
      %vm479 = vcmp.lt.s32.totalorder %v199, 16
      %v480 = vsel %vm479, %v476, %v478
      %v481 = vsel %vm479, %v478, %v476
      %v482 = vsel %vm209, %v481, 0.0
      %v483 = vsel %vm210, %v480, 0.0
      %v484 = vadd.f32 %v473, %v482
      %v485 = vadd.f32 %v474, %v483
      %487 = vset.pattern.permute.xlu0 0
      %488 = vperm.xlu0 %487, %v213
      %v489 = vpop.permute.xlu0 %488
      %v491 = vadd.f32 %v484, %v489
      %v492 = vadd.f32 %v485, %v489
      %v493 = vmax.f32 %v491, 0.0
      %v494 = vmax.f32 %v492, 0.0
      %v495 = vmin.f32 %v493, 6.0
      %v496 = vmin.f32 %v494, 6.0
      %v497 = vadd.f32 %v336, %v495
      %v498 = vadd.f32 %v337, %v496
      %v499 = vmax.f32 %v497, 0.0
      %v500 = vmax.f32 %v498, 0.0
      %501 = vst [vmem:[%s197] sm:$0xff] %v499
      %502 = vst [vmem:[%s197 + $0x8] sm:$0xff] %v500
      %p503 = scmp.lt.s32.totalorder %s15, 1
      %s504 = scalar_select %p503, %s15, 1
      %s505 = smul.addr %s504, 2
      %s506 = smul.addr %s505, 8
      %s507 = scalar_lea.vmem %s4, %s506
      // Predicated region
      $region37: #{block_t20_pallas.1} parent=35 // pred_check
        %p508 = pneg %p122
      $region38: #{block_t20_pallas.1} parent=35 // pred_check_branch
        %510 = sbr.rel (%p508) target = $region40
      $region39: #{block_t20_pallas.1} parent=35 // pred_region
        _
      $region40: #{block_t20_pallas.1} parent=35 // pred_fallthru
        _
    $region36: #{block_t20_pallas.1} parent=5 // pred_fallthru
      _
    %p511 = scmp.le.s32.totalorder 2, %s10
    // Predicated region
    $region41: #{block_t20_pallas.1} parent=5 // pred_check
      %p512 = pneg %p511
    $region42: #{block_t20_pallas.1} parent=5 // pred_check_branch
      %514 = sbr.rel (%p512) target = $region44
    $region43: #{block_t20_pallas.1} parent=5 // pred_region
      %s515 = ssub.s32 %s10, 2
      // Predicated region
      $region45: #{block_t20_pallas.1} parent=43 // pred_check
        %p516 = pneg %p128
      $region46: #{block_t20_pallas.1} parent=43 // pred_check_branch
        %518 = sbr.rel (%p516) target = $region48
      $region47: #{block_t20_pallas.1} parent=43 // pred_region
        %p519 = scmp.lt.s32.totalorder %s16, 1
        %s520 = scalar_select %p519, %s16, 1
        %s521 = smul.addr %s520, 2
        %s522 = smul.addr %s521, 8
        %s523 = scalar_lea.vmem %s4, %s522
      $region48: #{block_t20_pallas.1} parent=43 // pred_fallthru
        _
    $region44: #{block_t20_pallas.1} parent=5 // pred_fallthru
      _
  $region6: #{block_t20_pallas.1} parent=0 // loop_footer
    %s14 = sadd.s32 1, %s10
  $region7: #{block_t20_pallas.1} parent=0 // loop_footer_branch
    %9 = sbr.rel target = $region3
  $region8: #{block_t20_pallas.1} parent=0 // loop_exit
    _

</llo_original>
